<compile_context>
chip_gen: v5e
topology: v5e:2x2
jax: 0.10.0
libtpu: 0.0.40
codegen_flags: <defaults>
</compile_context>

<pallas_src>
import functools

import jax
import jax.numpy as jnp
from jax.experimental import pallas as pl
from jax.experimental.pallas import tpu as pltpu


def _round_up(v, m):
    return ((v + m - 1) // m) * m


def linear_logsoftmax_kernel(x_ref, w_ref, b_ref, o_ref):
    # x_ref: (TB, D)  w_ref: (D, Cp)  b_ref: (1, Cp)  o_ref: (TB, Cp)
    x = x_ref[...]
    w = w_ref[...]
    b = b_ref[...]
    # MXU matmul, f32 accumulation. Weight already (D, Cp): no transpose.
    logits = jnp.dot(x, w, preferred_element_type=jnp.float32) + b
    # Numerically stable log-softmax along the class (lane) axis.
    m = jnp.max(logits, axis=-1, keepdims=True)
    shifted = logits - m
    lse = jnp.log(jnp.sum(jnp.exp(shifted), axis=-1, keepdims=True))
    o_ref[...] = (shifted - lse).astype(o_ref.dtype)


@functools.partial(jax.jit, static_argnames=("block_b",))
def linear_logsoftmax(x, weight, bias, *, block_b=256):
    """x: (B, D) f32, weight: (C, D) f32 (nn.Linear layout), bias: (C,) f32.

    Returns log_softmax(x @ weight.T + bias, axis=1) as (B, C) f32.
    """
    B, D = x.shape
    C, D2 = weight.shape
    assert D == D2, (D, D2)

    # ---- Lane-dense class padding (multiple of 128). ----
    Cp = max(128, _round_up(C, 128))

    # ---- Batch tile: multiple of 8 sublanes, capped at block_b. ----
    TB = min(_round_up(block_b, 8), _round_up(B, 8))
    Bp = _round_up(B, TB)

    f32 = jnp.float32
    # Pre-transposed weight (D, Cp); padded class columns are zero.
    w_t = jnp.zeros((D, Cp), f32).at[:, :C].set(weight.T.astype(f32))
    # Bias (1, Cp); padded class entries get a huge negative value so that
    # exp(logit - max) underflows to 0 and they never win the row max.
    NEG = f32(-1e30)
    b2d = jnp.full((1, Cp), NEG, f32).at[0, :C].set(bias.astype(f32))
    # Pad batch rows so the grid divides evenly (padded rows are discarded).
    xp = x.astype(f32)
    if Bp != B:
        xp = jnp.zeros((Bp, D), f32).at[:B].set(xp)

    grid = (Bp // TB,)

    # NOTE: keeping f32 operands for bit-level-ish agreement with the f32
    # reference; cast x/w_t to bfloat16 here for peak MXU rate if accuracy
    # permits (keep preferred_element_type=f32 in the kernel).
    out = pl.pallas_call(
        linear_logsoftmax_kernel,
        out_shape=jax.ShapeDtypeStruct((Bp, Cp), f32),
        grid_spec=pltpu.PrefetchScalarGridSpec(
            num_scalar_prefetch=0,
            grid=grid,
            in_specs=[
                pl.BlockSpec((TB, D), lambda i: (i, 0)),   # x: tiled over batch
                pl.BlockSpec((D, Cp), lambda i: (0, 0)),   # weight: VMEM-resident
                pl.BlockSpec((1, Cp), lambda i: (0, 0)),   # bias:   VMEM-resident
            ],
            out_specs=pl.BlockSpec((TB, Cp), lambda i: (i, 0)),
        ),
        compiler_params=pltpu.CompilerParams(
            dimension_semantics=("parallel",),   # shard row blocks across TCs (v7x)
        ),
        cost_estimate=pl.CostEstimate(
            flops=2 * Bp * Cp * D,
            transcendentals=Bp * Cp,
            bytes_accessed=4 * (Bp * D + D * Cp + Bp * Cp),
        ),
    )(xp, w_t, b2d)

    # Strip batch / class padding.
    return out[:B, :C]


if __name__ == "__main__":
    key = jax.random.PRNGKey(0)
    k_x, k_w, k_b = jax.random.split(key, 3)

    batch = 8
    input_dim = 32
    nclass = 16

    # Deterministic parameter init (mimics nn.Linear's uniform(-1/sqrt(D), 1/sqrt(D)))
    bound = 1.0 / jnp.sqrt(jnp.float32(input_dim))
    x = jax.random.normal(k_x, (batch, input_dim), dtype=jnp.float32)
    weight = jax.random.uniform(k_w, (nclass, input_dim), dtype=jnp.float32,
                                minval=-bound, maxval=bound)
    bias = jax.random.uniform(k_b, (nclass,), dtype=jnp.float32,
                              minval=-bound, maxval=bound)

    out = linear_logsoftmax(x, weight, bias)
    out = jax.block_until_ready(out)

    # Reference check in plain JAX
    ref = jax.nn.log_softmax(x @ weight.T + bias, axis=1)
    assert out.shape == (batch, nclass)
    assert jnp.allclose(out, ref, atol=1e-5, rtol=1e-5), (
        float(jnp.max(jnp.abs(out - ref))))

    print("KERNEL_OK")
</pallas_src>

<mosaic_0001>
module attributes {stable_mosaic.version = 11 : i64} {
  func.func @linear_logsoftmax_kernel(%arg0: i32, %arg1: memref<8x32xf32, #tpu.memory_space<vmem>>, %arg2: memref<32x128xf32, #tpu.memory_space<vmem>>, %arg3: memref<1x128xf32, #tpu.memory_space<vmem>>, %arg4: memref<8x128xf32, #tpu.memory_space<vmem>>) attributes {dimension_semantics = [#tpu.dimension_semantics<parallel>], iteration_bounds = array<i64: 1>, scalar_prefetch = 0 : i64, scratch_operands = 0 : i64, tpu.core_type = #tpu.core_type<tc>, window_params = [{transform_indices = @transform_0, window_bounds = array<i64: 8, 32>}, {pipeline_mode = #tpu.pipeline_mode<synchronous>, transform_indices = @transform_1, window_bounds = array<i64: 32, 128>}, {pipeline_mode = #tpu.pipeline_mode<synchronous>, transform_indices = @transform_2, window_bounds = array<i64: 1, 128>}, {transform_indices = @transform_3, window_bounds = array<i64: 8, 128>}]} {
    %c0 = arith.constant 0 : index
    %c0_0 = arith.constant 0 : index
    %0 = vector.load %arg1[%c0, %c0_0] : memref<8x32xf32, #tpu.memory_space<vmem>>, vector<8x32xf32>
    %c0_1 = arith.constant 0 : index
    %c0_2 = arith.constant 0 : index
    %1 = vector.load %arg2[%c0_1, %c0_2] : memref<32x128xf32, #tpu.memory_space<vmem>>, vector<32x128xf32>
    %c0_3 = arith.constant 0 : index
    %c0_4 = arith.constant 0 : index
    %2 = vector.load %arg3[%c0_3, %c0_4] : memref<1x128xf32, #tpu.memory_space<vmem>>, vector<1x128xf32>
    %cst = arith.constant dense<0.000000e+00> : vector<8x128xf32>
    %3 = tpu.matmul %0, %1, %cst {dimension_numbers = #tpu.dot_dimension_numbers<[1], [0], [0], [1], [0, 0, 1, 1], [], []>} : vector<8x32xf32>, vector<32x128xf32>, vector<8x128xf32> -> vector<8x128xf32>
    %4 = vector.broadcast %2 : vector<1x128xf32> to vector<8x128xf32>
    %5 = arith.addf %3, %4 : vector<8x128xf32>
    %cst_5 = arith.constant dense<0xFF800000> : vector<8xf32>
    %6 = vector.multi_reduction <maximumf>, %5, %cst_5 [1] : vector<8x128xf32> to vector<8xf32>
    %7 = vector.shape_cast %6 : vector<8xf32> to vector<8x1xf32>
    %8 = vector.broadcast %7 : vector<8x1xf32> to vector<8x128xf32>
    %9 = arith.subf %5, %8 : vector<8x128xf32>
    %10 = math.exp %9 : vector<8x128xf32>
    %cst_6 = arith.constant dense<0.000000e+00> : vector<8xf32>
    %11 = vector.multi_reduction <add>, %10, %cst_6 [1] : vector<8x128xf32> to vector<8xf32>
    %12 = vector.shape_cast %11 : vector<8xf32> to vector<8x1xf32>
    %13 = math.log %12 : vector<8x1xf32>
    %14 = vector.broadcast %13 : vector<8x1xf32> to vector<8x128xf32>
    %15 = arith.subf %9, %14 : vector<8x128xf32>
    %c0_7 = arith.constant 0 : index
    %c0_8 = arith.constant 0 : index
    %16 = vector.load %arg4[%c0_7, %c0_8] : memref<8x128xf32, #tpu.memory_space<vmem>>, vector<8x128xf32>
    tpu.vector_store %arg4[%c0_7, %c0_8], %15 {strides = array<i32>} : memref<8x128xf32, #tpu.memory_space<vmem>>, vector<8x128xf32>,
    return
  }
  func.func @transform_0(%arg0: i32) -> (i32, i32) {
    %c0_i32 = arith.constant 0 : i32
    %c0_i32_0 = arith.constant 0 : i32
    return %arg0, %c0_i32 : i32, i32
  }
  func.func @transform_1(%arg0: i32) -> (i32, i32) {
    %c0_i32 = arith.constant 0 : i32
    %c0_i32_0 = arith.constant 0 : i32
    %c0_i32_1 = arith.constant 0 : i32
    return %c0_i32, %c0_i32_0 : i32, i32
  }
  func.func @transform_2(%arg0: i32) -> (i32, i32) {
    %c0_i32 = arith.constant 0 : i32
    %c0_i32_0 = arith.constant 0 : i32
    %c0_i32_1 = arith.constant 0 : i32
    return %c0_i32, %c0_i32_0 : i32, i32
  }
  func.func @transform_3(%arg0: i32) -> (i32, i32) {
    %c0_i32 = arith.constant 0 : i32
    %c0_i32_0 = arith.constant 0 : i32
    return %arg0, %c0_i32 : i32, i32
  }
}

</mosaic_0001>

<llo_original>
// kernel: linear_logsoftmax.1
$region0: #{linear_logsoftmax.1}
  #allocation0 [shape = 'u32[]', space=smem, size = 0x4, offset = 0x4, fixed_abs, tag = 'smem constant byte address 0x4 - core index']
  #allocation1 [shape = 'u32[72,128]{1,0:T(1,128)}', space=vmem, size = 0x9000, scoped, tag = 'internal scratch']
  %s0 = inlined_call_operand.vmem [shape: f32[8,32], index: 0, kind: input, shape index: {}]
  %s1 = inlined_call_operand.vmem [shape: f32[32,128], index: 1, kind: input, shape index: {}]
  %s2 = inlined_call_operand.vmem [shape: f32[1,128], index: 2, kind: input, shape index: {}]
  %s3 = inlined_call_operand.hbm [shape: f32[8,128], index: 3, kind: output, shape index: {}]
  %s4 = sld [smem:[#allocation0]]
  $region22: #{linear_logsoftmax.1} parent=0
    _
  %s6 = ssub.s32 1, %s4
  %s7 = scalar_select 0, %s6, %s4
  $region1: #{linear_logsoftmax.1} parent=0
    #allocation2 [shape = 'u8[4096]{0}', space=vmem, size = 0x1000, scoped, tag = 'output window, operand 0, single buffered']
    #allocation3 [shape = 's32[1]{0}', space=sflag, size = 0x4, scoped, tag = 'scoped memory for linear_logsoftmax.1']
    %8 = vsyncpa [#allocation3], 0
    // Predicated region
    $region2: #{linear_logsoftmax.1} parent=1 // pred_check
      _
    $region3: #{linear_logsoftmax.1} parent=1 // pred_check_branch
      %10 = sbr.rel (0) target = $region5
    $region4: #{linear_logsoftmax.1} parent=1 // pred_region
      _
    $region5: #{linear_logsoftmax.1} parent=1 // pred_fallthru
      _
    // Predicated region
    $region6: #{linear_logsoftmax.1} parent=1 // pred_check
      _
    $region7: #{linear_logsoftmax.1} parent=1 // pred_check_branch
      %12 = sbr.rel (0) target = $region9
    $region8: #{linear_logsoftmax.1} parent=1 // pred_region
      _
    $region9: #{linear_logsoftmax.1} parent=1 // pred_fallthru
      _
    // Predicated region
    $region10: #{linear_logsoftmax.1} parent=1 // pred_check
      _
    $region11: #{linear_logsoftmax.1} parent=1 // pred_check_branch
      %14 = sbr.rel (0) target = $region13
    $region12: #{linear_logsoftmax.1} parent=1 // pred_region
      _
    $region13: #{linear_logsoftmax.1} parent=1 // pred_fallthru
      _
    %v15 = vld [vmem:[%s0] sm:$0xff]
    %v16 = vld [vmem:[%s1] sm:$0xff]
    %v17 = vld [vmem:[%s1 + $0x8] sm:$0xff]
    %v18 = vld [vmem:[%s1 + $0x10] sm:$0xff]
    %v19 = vld [vmem:[%s1 + $0x18] sm:$0xff]
    %v20 = vld [vmem:[%s2] sm:$0x1]
    %v22 = vperm.slane %v20, 0
    %vm24 = vcmask 261120
    %v26 = vsel %vm24, %v15, 0
    %28 = vmatpush.msra.mxu0 0.0
    %29 = vmatpush.msra.mxu0 0.0
    %30 = vmatpush.msra.mxu0 0.0
    %31 = vmatpush.msra.mxu0 0.0
    %32 = vmatpush.msra.mxu0 0.0
    %33 = vmatpush.msra.mxu0 0.0
    %34 = vmatpush.msra.mxu0 0.0
    %35 = vmatpush.msra.mxu0 0.0
    %36 = vmatpush.msra.mxu0 0.0
    %37 = vmatpush.msra.mxu0 0.0
    %38 = vmatpush.msra.mxu0 0.0
    %39 = vmatpush.msra.mxu0 0.0
    %40 = vmatpush.msra.mxu0 %v19
    %41 = vmatpush.msra.mxu0 %v18
    %42 = vmatpush.msra.mxu0 %v17
    %43 = vmatpush.msra.mxu0 %v16
    %44 = vmatmul.f32.gmra.mxu0 %v26
    %v45 = vpop.f32.mrf.mxu0
    %v46 = vadd.f32 %v22, %v45
    %47 = vdwg.mxu0
    %48 = vmax.xlane.f32.xlu0 %v46
    %v49 = vpop.xlane.xlu0 %48
    %v50 = vsub.f32 %v46, %v49
    %v51 = vmul.f32 %v50, 1.442695
    %v52 = vpow.pop %v51
    %53 = vadd.xlane.f32.xlu0 %v52
    %v54 = vpop.xlane.xlu0 %53
    %v55 = vlog2.pop %v54
    %v56 = vmul.f32 %v55, 0.6931472
    %v57 = vsub.f32 %v50, %v56
    %58 = vst [vmem:[#allocation2] sm:$0xff] %v57
    // Predicated region
    $region14: #{linear_logsoftmax.1} parent=1 // pred_check
      _
    $region15: #{linear_logsoftmax.1} parent=1 // pred_check_branch
      %60 = sbr.rel (0) target = $region17
    $region16: #{linear_logsoftmax.1} parent=1 // pred_region
      %62 = vsyncadd [#allocation3], 0
      %s64 = sshll.u32 [#allocation2], 4
      %s65 = int_to_ptr.vmem [resolvable:$true] %s64
      %s66 = sshll.u32 %s3, 4
      %s67 = int_to_ptr.hbm [resolvable:$true] %s66
      %69 = dma.vmem_to_hbm [thread:$0]  %s65, 128, %s67, [#allocation3]
    $region17: #{linear_logsoftmax.1} parent=1 // pred_fallthru
      _
    // Predicated region
    $region18: #{linear_logsoftmax.1} parent=1 // pred_check
      _
    $region19: #{linear_logsoftmax.1} parent=1 // pred_check_branch
      %71 = sbr.rel (0) target = $region21
    $region20: #{linear_logsoftmax.1} parent=1 // pred_region
      %73 = dma.done [#allocation3], 128
    $region21: #{linear_logsoftmax.1} parent=1 // pred_fallthru
      _
    %74 = vsyncpa [#allocation3], 1

</llo_original>
